<compile_context>
chip_gen: v7x
topology: tpu7x:2x2x1
jax: 0.10.0
libtpu: 0.0.40
codegen_flags: <defaults>
</compile_context>

<pallas_src>
import functools

import jax
import jax.numpy as jnp
from jax import lax
from jax.experimental import pallas as pl
from jax.experimental.pallas import tpu as pltpu

_SENTINEL = 1.0e17  # finite: 8 * S^2 = 8e34 << 3.4e38, dominates any real distance


def _round_up(x, m):
    return (x + m - 1) // m * m


def _plan_tiles(B, n_pad, m_pad128):
    """Pick (batch_tile, m_tile, vmem_limit_bytes), generation-aware."""
    try:
        phys = int(pltpu.get_tpu_info().vmem_capacity_bytes)
    except Exception:
        phys = 64 * 1024 * 1024            # conservative fallback (v7x per-core VMEM)
    budget = min(phys // 2, 48 * 1024 * 1024)

    def usage(bt, m_tile):
        d_mat = 2 * 4 * bt * n_pad * m_tile     # distance tile + live MXU cross temp
        p1_in = 2 * 4 * bt * n_pad * 128        # (bt,n,8) lane-padded 8->128, x2 buffers
        p2_in = 2 * 4 * bt * 8 * m_tile         # (bt,8,m_tile), x2 buffers
        min1 = 4 * bt * n_pad * 128             # running-min scratch, lane-padded 1->128
        return d_mat + p1_in + p2_in + min1 + (1 << 19)

    m_tile = min(512, m_pad128)          # >=512-wide lane tiles approach roofline
    bt = min(8, B)
    while bt > 1 and -(-B // bt) < 2:    # keep >=2 parallel batch steps (v7x: 2 TCs)
        bt -= 1
    while bt > 1 and usage(bt, m_tile) > budget:
        bt -= 1
    while m_tile > 128 and usage(bt, m_tile) > budget:
        m_tile -= 128
    # TODO(synk): for very large N (>~8K points) also block N on a second
    # 'arbitrary' axis (running min for dist2 in scratch), and when
    # ceil(B/bt) < 2 split N as an extra 'parallel' axis to feed both v7x TCs.
    return bt, m_tile, budget


def _chamfer_kernel(p1_ref, p2c_ref, s1_ref, s2_ref, min1_ref, *, n_valid, m_valid):
    # p1_ref  : (bt, n_pad, d_pad)  cloud 1, channels-last; rows >= N are sentinel
    # p2c_ref : (bt, d_pad, m_tile) cloud 2, channels-first; cols >= M are sentinel
    # s1_ref  : (1, 1, 1) sum_i dist1 for this batch block (written at last M tile)
    # s2_ref  : (1, 1, 1) sum_j dist2 for this batch block (accumulated over M tiles)
    # min1_ref: (bt, n_pad, 1) VMEM scratch: running min_j d[b, i, j]
    km = pl.program_id(1)
    _, n_pad, _ = p1_ref.shape
    m_tile = p2c_ref.shape[2]

    @pl.when(km == 0)
    def _init():
        min1_ref[...] = jnp.full(min1_ref.shape, jnp.inf, min1_ref.dtype)
        s1_ref[...] = jnp.zeros(s1_ref.shape, s1_ref.dtype)
        s2_ref[...] = jnp.zeros(s2_ref.shape, s2_ref.dtype)

    p1 = p1_ref[...]                                     # (bt, n_pad, d_pad) f32
    p2 = p2c_ref[...]                                    # (bt, d_pad, m_tile) f32

    # MXU cross term: ||x - y||^2 = ||x||^2 + ||y||^2 - 2 x.y  (f32 accumulation).
    cross = lax.dot_general(
        p1, p2, dimension_numbers=(((2,), (1,)), ((0,), (0,))),
        preferred_element_type=jnp.float32)              # (bt, n_pad, m_tile)
    sq1 = jnp.sum(p1 * p1, axis=2, keepdims=True)        # (bt, n_pad, 1)
    sq2 = jnp.sum(p2 * p2, axis=1, keepdims=True)        # (bt, 1, m_tile)
    d = jnp.maximum(sq1 + sq2 - 2.0 * cross, 0.0)        # clamp cancellation negatives

    # dist1[b, i]: running min over the M tiles (lane-axis min).
    min1_ref[...] = jnp.minimum(min1_ref[...], jnp.min(d, axis=2, keepdims=True))

    # dist2[b, j]: N is whole inside the block, so every column of this tile is
    # already fully reduced over i; mask sentinel-padded columns, accumulate sum.
    col = km * m_tile + lax.broadcasted_iota(jnp.int32, (1, 1, m_tile), 2)
    min2 = jnp.where(col < m_valid, jnp.min(d, axis=1, keepdims=True), 0.0)
    s2_ref[...] = s2_ref[...] + jnp.sum(
        jnp.sum(min2, axis=2, keepdims=True), axis=0, keepdims=True)

    @pl.when(km == pl.num_programs(1) - 1)
    def _finalize():
        row = lax.broadcasted_iota(jnp.int32, (1, n_pad, 1), 1)
        m1 = jnp.where(row < n_valid, min1_ref[...], 0.0)
        s1_ref[...] = jnp.sum(jnp.sum(m1, axis=1, keepdims=True),
                              axis=0, keepdims=True)


def chamfers_distance_loss(input1, input2):
    """Equivalent of ChamfersDistance.forward: mean(dist1) + mean(dist2)."""
    B, N, D = input1.shape
    B2, M, D2 = input2.shape
    assert B == B2 and D == D2

    f32 = jnp.float32
    d_pad = _round_up(max(D, 1), 8)        # contraction dim, sublane aligned
    n_pad = _round_up(max(N, 1), 8)        # sublane alignment
    m_pad128 = _round_up(max(M, 1), 128)   # lane alignment

    bt, m_tile, vmem_limit = _plan_tiles(B, n_pad, m_pad128)
    m_pad = _round_up(M, m_tile)
    g_b = -(-B // bt)
    g_m = m_pad // m_tile
    b_pad = g_b * bt

    # Cloud 1, channels-last: valid points get zero pad-coords; padded rows of
    # valid batches are sentinel (huge distance -> never win a min); padded
    # batch blocks are all-zero (contribute exactly 0).
    p1_valid = jnp.pad(input1.astype(f32), ((0, 0), (0, 0), (0, d_pad - D)))
    p1 = jnp.full((b_pad, n_pad, d_pad), _SENTINEL, f32)
    p1 = p1.at[B:].set(0.0)
    p1 = p1.at[:B, :N, :].set(p1_valid)

    # Cloud 2, channels-first (lane-dense M axis), same sentinel scheme on cols.
    p2_valid = jnp.pad(jnp.transpose(input2.astype(f32), (0, 2, 1)),
                       ((0, 0), (0, d_pad - D), (0, 0)))
    p2c = jnp.full((b_pad, d_pad, m_pad), _SENTINEL, f32)
    p2c = p2c.at[B:].set(0.0)
    p2c = p2c.at[:B, :, :M].set(p2_valid)

    kernel = functools.partial(_chamfer_kernel, n_valid=N, m_valid=M)

    s1, s2 = pl.pallas_call(
        kernel,
        out_shape=(
            jax.ShapeDtypeStruct((g_b, 1, 1), f32),
            jax.ShapeDtypeStruct((g_b, 1, 1), f32),
        ),
        grid_spec=pltpu.PrefetchScalarGridSpec(
            num_scalar_prefetch=0,
            grid=(g_b, g_m),                      # batch parallel, M-tiles arbitrary
            in_specs=[
                pl.BlockSpec((bt, n_pad, d_pad), lambda b, km: (b, 0, 0)),
                pl.BlockSpec((bt, d_pad, m_tile), lambda b, km: (b, 0, km)),
            ],
            out_specs=[
                pl.BlockSpec((1, 1, 1), lambda b, km: (b, 0, 0)),
                pl.BlockSpec((1, 1, 1), lambda b, km: (b, 0, 0)),
            ],
            scratch_shapes=[pltpu.VMEM((bt, n_pad, 1), f32)],
        ),
        compiler_params=pltpu.CompilerParams(
            dimension_semantics=("parallel", "arbitrary"),
            vmem_limit_bytes=int(vmem_limit),
        ),
    )(p1, p2c)

    return jnp.sum(s1) / (B * N) + jnp.sum(s2) / (B * M)


def _reference_loss(p1, p2):
    # Pure-JAX reference for correctness checking (small shapes only).
    diff = p1[:, :, None, :] - p2[:, None, :, :]           # (B, N, M, 3)
    d = jnp.sum(diff * diff, axis=-1)                      # (B, N, M)
    return jnp.mean(jnp.min(d, axis=2)) + jnp.mean(jnp.min(d, axis=1))


if __name__ == "__main__":
    key = jax.random.PRNGKey(0)
    k1, k2 = jax.random.split(key)

    B, N, M, D = 2, 128, 96, 3
    input1 = jax.random.normal(k1, (B, N, D), dtype=jnp.float32)
    input2 = jax.random.normal(k2, (B, M, D), dtype=jnp.float32)

    loss = jax.jit(chamfers_distance_loss)(input1, input2)
    loss = jax.block_until_ready(loss)

    ref = _reference_loss(input1, input2)
    if not jnp.allclose(loss, ref, rtol=1e-4, atol=1e-4):
        raise AssertionError(f"mismatch: pallas={loss} ref={ref}")

    print("KERNEL_OK")
</pallas_src>

<mosaic_0001>
module attributes {stable_mosaic.version = 11 : i64} {
  func.func @_chamfer_kernel(%arg0: i32, %arg1: i32, %arg2: memref<1x128x8xf32, #tpu.memory_space<vmem>>, %arg3: memref<1x8x128xf32, #tpu.memory_space<vmem>>, %arg4: memref<1x1x1xf32, #tpu.memory_space<vmem>>, %arg5: memref<1x1x1xf32, #tpu.memory_space<vmem>>, %arg6: memref<1x128x1xf32, #tpu.memory_space<vmem>>) attributes {dimension_semantics = [#tpu.dimension_semantics<parallel>, #tpu.dimension_semantics<arbitrary>], iteration_bounds = array<i64: 2, 1>, scalar_prefetch = 0 : i64, scratch_operands = 1 : i64, tpu.core_type = #tpu.core_type<tc>, window_params = [{transform_indices = @transform_0, window_bounds = array<i64: 1, 128, 8>}, {transform_indices = @transform_1, window_bounds = array<i64: 1, 8, 128>}, {transform_indices = @transform_2, window_bounds = array<i64: 1, 1, 1>}, {transform_indices = @transform_3, window_bounds = array<i64: 1, 1, 1>}]} {
    %c0_i32 = arith.constant 0 : i32
    %0 = arith.cmpi eq, %arg1, %c0_i32 : i32
    %1 = arith.extui %0 : i1 to i32
    %c0_i32_0 = arith.constant 0 : i32
    %2 = arith.cmpi ne, %1, %c0_i32_0 : i32
    scf.if %2 {
      %cst_29 = arith.constant 0x7F800000 : f32
      %45 = vector.broadcast %cst_29 : f32 to vector<1x128x1xf32>
      %c0_30 = arith.constant 0 : index
      %c0_31 = arith.constant 0 : index
      %c0_32 = arith.constant 0 : index
      %46 = vector.load %arg6[%c0_30, %c0_31, %c0_32] : memref<1x128x1xf32, #tpu.memory_space<vmem>>, vector<1x128x1xf32>
      tpu.vector_store %arg6[%c0_30, %c0_31, %c0_32], %45 {strides = array<i32>} : memref<1x128x1xf32, #tpu.memory_space<vmem>>, vector<1x128x1xf32>,
      %cst_33 = arith.constant 0.000000e+00 : f32
      %47 = vector.broadcast %cst_33 : f32 to vector<1x1x1xf32>
      %c0_34 = arith.constant 0 : index
      %c0_35 = arith.constant 0 : index
      %c0_36 = arith.constant 0 : index
      %48 = vector.load %arg4[%c0_34, %c0_35, %c0_36] : memref<1x1x1xf32, #tpu.memory_space<vmem>>, vector<1x1x1xf32>
      tpu.vector_store %arg4[%c0_34, %c0_35, %c0_36], %47 {strides = array<i32>} : memref<1x1x1xf32, #tpu.memory_space<vmem>>, vector<1x1x1xf32>,
      %cst_37 = arith.constant 0.000000e+00 : f32
      %49 = vector.broadcast %cst_37 : f32 to vector<1x1x1xf32>
      %c0_38 = arith.constant 0 : index
      %c0_39 = arith.constant 0 : index
      %c0_40 = arith.constant 0 : index
      %50 = vector.load %arg5[%c0_38, %c0_39, %c0_40] : memref<1x1x1xf32, #tpu.memory_space<vmem>>, vector<1x1x1xf32>
      tpu.vector_store %arg5[%c0_38, %c0_39, %c0_40], %49 {strides = array<i32>} : memref<1x1x1xf32, #tpu.memory_space<vmem>>, vector<1x1x1xf32>,
    } else {
    }
    %c0 = arith.constant 0 : index
    %c0_1 = arith.constant 0 : index
    %c0_2 = arith.constant 0 : index
    %3 = vector.load %arg2[%c0, %c0_1, %c0_2] : memref<1x128x8xf32, #tpu.memory_space<vmem>>, vector<1x128x8xf32>
    %c0_3 = arith.constant 0 : index
    %c0_4 = arith.constant 0 : index
    %c0_5 = arith.constant 0 : index
    %4 = vector.load %arg3[%c0_3, %c0_4, %c0_5] : memref<1x8x128xf32, #tpu.memory_space<vmem>>, vector<1x8x128xf32>
    %cst = arith.constant dense<0.000000e+00> : vector<1x128x128xf32>
    %5 = tpu.matmul %3, %4, %cst {dimension_numbers = #tpu.dot_dimension_numbers<[2], [1], [1], [2], [0, 0, 0, 1, 1, 2], [0], [0]>} : vector<1x128x8xf32>, vector<1x8x128xf32>, vector<1x128x128xf32> -> vector<1x128x128xf32>
    %6 = arith.mulf %3, %3 : vector<1x128x8xf32>
    %cst_6 = arith.constant dense<0.000000e+00> : vector<1x128xf32>
    %7 = vector.multi_reduction <add>, %6, %cst_6 [2] : vector<1x128x8xf32> to vector<1x128xf32>
    %8 = vector.shape_cast %7 : vector<1x128xf32> to vector<1x128x1xf32>
    %9 = arith.mulf %4, %4 : vector<1x8x128xf32>
    %cst_7 = arith.constant dense<0.000000e+00> : vector<1x128xf32>
    %10 = vector.multi_reduction <add>, %9, %cst_7 [1] : vector<1x8x128xf32> to vector<1x128xf32>
    %11 = vector.shape_cast %10 : vector<1x128xf32> to vector<1x1x128xf32>
    %12 = vector.broadcast %8 : vector<1x128x1xf32> to vector<1x128x128xf32>
    %13 = vector.broadcast %11 : vector<1x1x128xf32> to vector<1x128x128xf32>
    %14 = arith.addf %12, %13 : vector<1x128x128xf32>
    %cst_8 = arith.constant 2.000000e+00 : f32
    %15 = vector.broadcast %cst_8 : f32 to vector<1x128x128xf32>
    %16 = arith.mulf %15, %5 : vector<1x128x128xf32>
    %17 = arith.subf %14, %16 : vector<1x128x128xf32>
    %cst_9 = arith.constant 0.000000e+00 : f32
    %18 = vector.broadcast %cst_9 : f32 to vector<1x128x128xf32>
    %19 = arith.maximumf %17, %18 : vector<1x128x128xf32>
    %c0_10 = arith.constant 0 : index
    %c0_11 = arith.constant 0 : index
    %c0_12 = arith.constant 0 : index
    %20 = vector.load %arg6[%c0_10, %c0_11, %c0_12] : memref<1x128x1xf32, #tpu.memory_space<vmem>>, vector<1x128x1xf32>
    %cst_13 = arith.constant dense<0x7F800000> : vector<1x128xf32>
    %21 = vector.multi_reduction <minimumf>, %19, %cst_13 [2] : vector<1x128x128xf32> to vector<1x128xf32>
    %22 = vector.shape_cast %21 : vector<1x128xf32> to vector<1x128x1xf32>
    %23 = arith.minimumf %20, %22 : vector<1x128x1xf32>
    %c0_14 = arith.constant 0 : index
    %c0_15 = arith.constant 0 : index
    %c0_16 = arith.constant 0 : index
    %24 = vector.load %arg6[%c0_14, %c0_15, %c0_16] : memref<1x128x1xf32, #tpu.memory_space<vmem>>, vector<1x128x1xf32>
    tpu.vector_store %arg6[%c0_14, %c0_15, %c0_16], %23 {strides = array<i32>} : memref<1x128x1xf32, #tpu.memory_space<vmem>>, vector<1x128x1xf32>,
    %c128_i32 = arith.constant 128 : i32
    %25 = arith.muli %arg1, %c128_i32 : i32
    %26 = tpu.iota {dimensions = array<i32: 2>} : vector<1x1x128xi32>
    %27 = vector.broadcast %25 : i32 to vector<1x1x128xi32>
    %28 = arith.addi %27, %26 : vector<1x1x128xi32>
    %c96_i32 = arith.constant 96 : i32
    %29 = vector.broadcast %c96_i32 : i32 to vector<1x1x128xi32>
    %30 = arith.cmpi slt, %28, %29 : vector<1x1x128xi32>
    %cst_17 = arith.constant dense<0x7F800000> : vector<1x128xf32>
    %31 = vector.multi_reduction <minimumf>, %19, %cst_17 [1] : vector<1x128x128xf32> to vector<1x128xf32>
    %32 = vector.shape_cast %31 : vector<1x128xf32> to vector<1x1x128xf32>
    %cst_18 = arith.constant 0.000000e+00 : f32
    %33 = vector.broadcast %cst_18 : f32 to vector<1x1x128xf32>
    %34 = arith.select %30, %32, %33 : vector<1x1x128xi1>, vector<1x1x128xf32>
    %c0_19 = arith.constant 0 : index
    %c0_20 = arith.constant 0 : index
    %c0_21 = arith.constant 0 : index
    %35 = vector.load %arg5[%c0_19, %c0_20, %c0_21] : memref<1x1x1xf32, #tpu.memory_space<vmem>>, vector<1x1x1xf32>
    %cst_22 = arith.constant dense<0.000000e+00> : vector<1x1xf32>
    %36 = vector.multi_reduction <add>, %34, %cst_22 [2] : vector<1x1x128xf32> to vector<1x1xf32>
    %37 = vector.shape_cast %36 : vector<1x1xf32> to vector<1x1x1xf32>
    %cst_23 = arith.constant dense<0.000000e+00> : vector<1x1xf32>
    %38 = vector.multi_reduction <add>, %37, %cst_23 [0] : vector<1x1x1xf32> to vector<1x1xf32>
    %39 = vector.shape_cast %38 : vector<1x1xf32> to vector<1x1x1xf32>
    %40 = arith.addf %35, %39 : vector<1x1x1xf32>
    %c0_24 = arith.constant 0 : index
    %c0_25 = arith.constant 0 : index
    %c0_26 = arith.constant 0 : index
    %41 = vector.load %arg5[%c0_24, %c0_25, %c0_26] : memref<1x1x1xf32, #tpu.memory_space<vmem>>, vector<1x1x1xf32>
    tpu.vector_store %arg5[%c0_24, %c0_25, %c0_26], %40 {strides = array<i32>} : memref<1x1x1xf32, #tpu.memory_space<vmem>>, vector<1x1x1xf32>,
    %c0_i32_27 = arith.constant 0 : i32
    %42 = arith.cmpi eq, %arg1, %c0_i32_27 : i32
    %43 = arith.extui %42 : i1 to i32
    %c0_i32_28 = arith.constant 0 : i32
    %44 = arith.cmpi ne, %43, %c0_i32_28 : i32
    scf.if %44 {
      %45 = tpu.iota {dimensions = array<i32: 1>} : vector<1x128x1xi32>
      %c128_i32_29 = arith.constant 128 : i32
      %46 = vector.broadcast %c128_i32_29 : i32 to vector<1x128x1xi32>
      %47 = arith.cmpi slt, %45, %46 : vector<1x128x1xi32>
      %c0_30 = arith.constant 0 : index
      %c0_31 = arith.constant 0 : index
      %c0_32 = arith.constant 0 : index
      %48 = vector.load %arg6[%c0_30, %c0_31, %c0_32] : memref<1x128x1xf32, #tpu.memory_space<vmem>>, vector<1x128x1xf32>
      %cst_33 = arith.constant 0.000000e+00 : f32
      %49 = vector.broadcast %cst_33 : f32 to vector<1x128x1xf32>
      %50 = arith.select %47, %48, %49 : vector<1x128x1xi1>, vector<1x128x1xf32>
      %cst_34 = arith.constant dense<0.000000e+00> : vector<1x1xf32>
      %51 = vector.multi_reduction <add>, %50, %cst_34 [1] : vector<1x128x1xf32> to vector<1x1xf32>
      %52 = vector.shape_cast %51 : vector<1x1xf32> to vector<1x1x1xf32>
      %cst_35 = arith.constant dense<0.000000e+00> : vector<1x1xf32>
      %53 = vector.multi_reduction <add>, %52, %cst_35 [0] : vector<1x1x1xf32> to vector<1x1xf32>
      %54 = vector.shape_cast %53 : vector<1x1xf32> to vector<1x1x1xf32>
      %c0_36 = arith.constant 0 : index
      %c0_37 = arith.constant 0 : index
      %c0_38 = arith.constant 0 : index
      %55 = vector.load %arg4[%c0_36, %c0_37, %c0_38] : memref<1x1x1xf32, #tpu.memory_space<vmem>>, vector<1x1x1xf32>
      tpu.vector_store %arg4[%c0_36, %c0_37, %c0_38], %54 {strides = array<i32>} : memref<1x1x1xf32, #tpu.memory_space<vmem>>, vector<1x1x1xf32>,
    } else {
    }
    return
  }
  func.func @transform_0(%arg0: i32, %arg1: i32) -> (i32, i32, i32) {
    %c0_i32 = arith.constant 0 : i32
    %c0_i32_0 = arith.constant 0 : i32
    %c0_i32_1 = arith.constant 0 : i32
    return %arg0, %c0_i32, %c0_i32_0 : i32, i32, i32
  }
  func.func @transform_1(%arg0: i32, %arg1: i32) -> (i32, i32, i32) {
    %c0_i32 = arith.constant 0 : i32
    %c0_i32_0 = arith.constant 0 : i32
    return %arg0, %c0_i32, %arg1 : i32, i32, i32
  }
  func.func @transform_2(%arg0: i32, %arg1: i32) -> (i32, i32, i32) {
    %c0_i32 = arith.constant 0 : i32
    %c0_i32_0 = arith.constant 0 : i32
    %c0_i32_1 = arith.constant 0 : i32
    return %arg0, %c0_i32, %c0_i32_0 : i32, i32, i32
  }
  func.func @transform_3(%arg0: i32, %arg1: i32) -> (i32, i32, i32) {
    %c0_i32 = arith.constant 0 : i32
    %c0_i32_0 = arith.constant 0 : i32
    %c0_i32_1 = arith.constant 0 : i32
    return %arg0, %c0_i32, %c0_i32_0 : i32, i32, i32
  }
}

</mosaic_0001>

<llo_original>
// kernel: chamfers_distance_loss.1
$region0: #{chamfers_distance_loss.1}
  #allocation0 [shape = 'u32[]', space=smem, size = 0x4, offset = 0x4, fixed_abs, tag = 'smem constant byte address 0x4 - core index']
  #allocation1 [shape = 'u32[144,128]{1,0:T(1,128)}', space=vmem, size = 0x12000, scoped, tag = 'internal scratch']
  #allocation2 [shape = 'f32[1,128,1]{2,1,0:T(8,128)}', space=vmem, size = 0x10000, scoped, tag = 'scratch operand']
  %s0 = inlined_call_operand.vmem [shape: f32[2,128,8], index: 0, kind: input, shape index: {}]
  %s1 = inlined_call_operand.vmem [shape: f32[2,8,128], index: 1, kind: input, shape index: {}]
  %s2 = inlined_call_operand.vmem [shape: f32[2,1,1], index: 2, kind: output, shape index: {0}]
  %s3 = inlined_call_operand.vmem [shape: f32[2,1,1], index: 3, kind: output, shape index: {1}]
  %4 = xla_tuple %s2, %s3
  %s5 = sld [smem:[#allocation0]]
  $region57: #{chamfers_distance_loss.1} parent=0
    _
  %s7 = ssub.s32 1, %s5
  %s8 = scalar_select 0, %s7, %s5
  loop: start=0, step=1, limit=4
  $region2: #{chamfers_distance_loss.1} parent=0 // loop_pre_header
    _
  $region3: #{chamfers_distance_loss.1} parent=0 // loop_header
    %s10 = sphi 0, %s14
    %p11 = scmp.ge.s32.totalorder %s10, 4
    %s17 = sphi 0, %s29
    %s18 = sphi 0, %s25
    %s19 = sphi 0, %s17
    %s20 = sphi 0, %s18
    %s21 = sphi 0, %s19
    %s22 = sphi 0, %s20
    %s32 = sphi 0, %s34
    %s35 = sphi 0, %s32
    %s36 = sphi 0, %s35
    %s52 = sphi 0, %s36
    %s60 = sphi 0, %s62
    %s63 = sphi 0, %s60
    %s64 = sphi 0, %s63
    %s80 = sphi 0, %s64
    %s86 = sphi 0, %s88
    %s89 = sphi 0, %s86
    %s90 = sphi 0, %s89
    %s106 = sphi 0, %s90
    %s112 = sphi 0, %s114
    %s115 = sphi 0, %s112
    %s116 = sphi 0, %s115
    %s132 = sphi 0, %s116
  $region4: #{chamfers_distance_loss.1} parent=0 // loop_header_branch
    %13 = sbr.rel (%p11) target = $region8
  $region5: #{chamfers_distance_loss.1} parent=0 // loop_body
    %s15 = ssub.s32 %s10, 1
    %s16 = ssub.s32 %s10, 2
    %s23 = sadd.s32 1, %s18
    %p24 = scmp.ge.s32.totalorder %s23, 1
    %s25 = scalar_select %p24, 0, %s23
    %s26 = sadd.s32 1, %s17
    %s27 = scalar_select %p24, %s26, %s17
    %p28 = scmp.ge.s32.totalorder %s27, 2
    %s29 = scalar_select %p28, 0, %s27
    %s30 = ssub.s32 %s17, %s29
    %p31 = scmp.eq.s32.totalorder %s30, 0
    %s33 = sadd.s32 %s32, 1
    %s34 = scalar_select %p31, %s32, %s33
    %p37 = pneg %p31
    %p38 = scmp.eq.s32.totalorder %s10, 1
    %p39 = por %p37, %p38
    %p40 = scmp.ne.s32.totalorder %s32, %s35
    %p41 = scmp.eq.s32.totalorder %s10, 0
    %p42 = por %p40, %p41
    %p43 = scmp.ne.s32.totalorder %s32, %s35
    %p44 = scmp.eq.s32.totalorder %s15, 1
    %p45 = por %p43, %p44
    %p46 = scmp.ne.s32.totalorder %s35, %s36
    %p47 = scmp.eq.s32.totalorder %s15, 0
    %p48 = por %p46, %p47
    %p49 = scmp.ne.s32.totalorder %s35, %s36
    %p50 = scmp.eq.s32.totalorder %s16, 1
    %p51 = por %p49, %p50
    %p53 = scmp.ne.s32.totalorder %s36, %s52
    %p54 = scmp.eq.s32.totalorder %s16, 0
    %p55 = por %p53, %p54
    %s56 = ssub.s32 %s17, %s29
    %s57 = ssub.s32 %s18, %s25
    %s58 = sor.u32 %s56, %s57
    %p59 = scmp.eq.s32.totalorder %s58, 0
    %s61 = sadd.s32 %s60, 1
    %s62 = scalar_select %p59, %s60, %s61
    %p65 = pneg %p59
    %p66 = scmp.eq.s32.totalorder %s10, 1
    %p67 = por %p65, %p66
    %p68 = scmp.ne.s32.totalorder %s60, %s63
    %p69 = scmp.eq.s32.totalorder %s10, 0
    %p70 = por %p68, %p69
    %p71 = scmp.ne.s32.totalorder %s60, %s63
    %p72 = scmp.eq.s32.totalorder %s15, 1
    %p73 = por %p71, %p72
    %p74 = scmp.ne.s32.totalorder %s63, %s64
    %p75 = scmp.eq.s32.totalorder %s15, 0
    %p76 = por %p74, %p75
    %p77 = scmp.ne.s32.totalorder %s63, %s64
    %p78 = scmp.eq.s32.totalorder %s16, 1
    %p79 = por %p77, %p78
    %p81 = scmp.ne.s32.totalorder %s64, %s80
    %p82 = scmp.eq.s32.totalorder %s16, 0
    %p83 = por %p81, %p82
    %s84 = ssub.s32 %s17, %s29
    %p85 = scmp.eq.s32.totalorder %s84, 0
    %s87 = sadd.s32 %s86, 1
    %s88 = scalar_select %p85, %s86, %s87
    %p91 = pneg %p85
    %p92 = scmp.eq.s32.totalorder %s10, 1
    %p93 = por %p91, %p92
    %p94 = scmp.ne.s32.totalorder %s86, %s89
    %p95 = scmp.eq.s32.totalorder %s10, 0
    %p96 = por %p94, %p95
    %p97 = scmp.ne.s32.totalorder %s86, %s89
    %p98 = scmp.eq.s32.totalorder %s15, 1
    %p99 = por %p97, %p98
    %p100 = scmp.ne.s32.totalorder %s89, %s90
    %p101 = scmp.eq.s32.totalorder %s15, 0
    %p102 = por %p100, %p101
    %p103 = scmp.ne.s32.totalorder %s89, %s90
    %p104 = scmp.eq.s32.totalorder %s16, 1
    %p105 = por %p103, %p104
    %p107 = scmp.ne.s32.totalorder %s90, %s106
    %p108 = scmp.eq.s32.totalorder %s16, 0
    %p109 = por %p107, %p108
    %s110 = ssub.s32 %s17, %s29
    %p111 = scmp.eq.s32.totalorder %s110, 0
    %s113 = sadd.s32 %s112, 1
    %s114 = scalar_select %p111, %s112, %s113
    %p117 = pneg %p111
    %p118 = scmp.eq.s32.totalorder %s10, 1
    %p119 = por %p117, %p118
    %p120 = scmp.ne.s32.totalorder %s112, %s115
    %p121 = scmp.eq.s32.totalorder %s10, 0
    %p122 = por %p120, %p121
    %p123 = scmp.ne.s32.totalorder %s112, %s115
    %p124 = scmp.eq.s32.totalorder %s15, 1
    %p125 = por %p123, %p124
    %p126 = scmp.ne.s32.totalorder %s115, %s116
    %p127 = scmp.eq.s32.totalorder %s15, 0
    %p128 = por %p126, %p127
    %p129 = scmp.ne.s32.totalorder %s115, %s116
    %p130 = scmp.eq.s32.totalorder %s16, 1
    %p131 = por %p129, %p130
    %p133 = scmp.ne.s32.totalorder %s116, %s132
    %p134 = scmp.eq.s32.totalorder %s16, 0
    %p135 = por %p133, %p134
    %p136 = scmp.le.s32.totalorder 1, %s10
    %p137 = scmp.lt.s32.totalorder %s10, 3
    %p138 = pnand %p136, %p137
    %p139 = pneg %p138
    // Predicated region
    $region9: #{chamfers_distance_loss.1} parent=5 // pred_check
      _
    $region10: #{chamfers_distance_loss.1} parent=5 // pred_check_branch
      %141 = sbr.rel (%p138) target = $region12
    $region11: #{chamfers_distance_loss.1} parent=5 // pred_region
      %s142 = ssub.s32 %s10, 1
    $region12: #{chamfers_distance_loss.1} parent=5 // pred_fallthru
      _
    %p143 = scmp.lt.s32.totalorder %s10, 2
    // Predicated region
    $region13: #{chamfers_distance_loss.1} parent=5 // pred_check
      %p144 = pneg %p143
    $region14: #{chamfers_distance_loss.1} parent=5 // pred_check_branch
      %146 = sbr.rel (%p144) target = $region16
    $region15: #{chamfers_distance_loss.1} parent=5 // pred_region
      // Predicated region
      $region17: #{chamfers_distance_loss.1} parent=15 // pred_check
        %p147 = pneg %p42
      $region18: #{chamfers_distance_loss.1} parent=15 // pred_check_branch
        %149 = sbr.rel (%p147) target = $region20
      $region19: #{chamfers_distance_loss.1} parent=15 // pred_region
        %p150 = scmp.lt.s32.totalorder %s17, 1
        %s151 = scalar_select %p150, %s17, 1
        %s152 = smul.addr %s151, 16
        %s153 = smul.addr %s152, 8
        %s154 = scalar_lea.vmem %s0, %s153
      $region20: #{chamfers_distance_loss.1} parent=15 // pred_fallthru
        _
      // Predicated region
      $region21: #{chamfers_distance_loss.1} parent=15 // pred_check
        %p155 = pneg %p70
      $region22: #{chamfers_distance_loss.1} parent=15 // pred_check_branch
        %157 = sbr.rel (%p155) target = $region24
      $region23: #{chamfers_distance_loss.1} parent=15 // pred_region
        %p158 = scmp.lt.s32.totalorder %s17, 1
        %s159 = scalar_select %p158, %s17, 1
        %p160 = scmp.lt.s32.totalorder %s18, 0
        %s161 = scalar_select %p160, %s18, 0
        %s162 = sadd.s32 %s161, %s159
        %s163 = smul.addr %s162, 8
        %s164 = scalar_lea.vmem %s1, %s163
      $region24: #{chamfers_distance_loss.1} parent=15 // pred_fallthru
        _
    $region16: #{chamfers_distance_loss.1} parent=5 // pred_fallthru
      _
    %p165 = scmp.le.s32.totalorder 1, %s10
    %p166 = scmp.lt.s32.totalorder %s10, 3
    %p167 = pnand %p165, %p166
    %p168 = pneg %p167
    // Predicated region
    $region25: #{chamfers_distance_loss.1} parent=5 // pred_check
      _
    $region26: #{chamfers_distance_loss.1} parent=5 // pred_check_branch
      %170 = sbr.rel (%p167) target = $region28
    $region27: #{chamfers_distance_loss.1} parent=5 // pred_region
      %s171 = ssub.s32 %s10, 1
      %p172 = scmp.lt.s32.totalorder %s19, 1
      %s173 = scalar_select %p172, %s19, 1
      %s174 = smul.addr %s173, 16
      %s175 = smul.addr %s174, 8
      %s176 = scalar_lea.vmem %s0, %s175
      %p177 = pneg %p48
      %p178 = pneg %p45
      %p179 = scmp.lt.s32.totalorder %s19, 1
      %s180 = scalar_select %p179, %s19, 1
      %p181 = scmp.lt.s32.totalorder %s20, 0
      %s182 = scalar_select %p181, %s20, 0
      %s183 = sadd.s32 %s182, %s180
      %s184 = smul.addr %s183, 8
      %s185 = scalar_lea.vmem %s1, %s184
      %p186 = pneg %p76
      %p187 = pneg %p73
      %p188 = pneg %p102
      %p189 = pneg %p99
      %p190 = scmp.lt.s32.totalorder %s19, 1
      %s191 = scalar_select %p190, %s19, 1
      %s192 = scalar_lea.vmem %s2, %s191
      %p193 = pneg %p128
      %p194 = pneg %p125
      %p195 = scmp.lt.s32.totalorder %s19, 1
      %s196 = scalar_select %p195, %s19, 1
      %s197 = scalar_lea.vmem %s3, %s196
      %p198 = scmp.lt.s32.totalorder %s19, 1
      %s199 = scalar_select %p198, %s19, 1
      %s200 = smul.addr %s199, 16
      %s201 = smul.addr %s200, 8
      %s202 = scalar_lea.vmem %s0, %s201
      %p203 = scmp.lt.s32.totalorder %s19, 1
      %s204 = scalar_select %p203, %s19, 1
      %p205 = scmp.lt.s32.totalorder %s20, 0
      %s206 = scalar_select %p205, %s20, 0
      %s207 = sadd.s32 %s206, %s204
      %s208 = smul.addr %s207, 8
      %s209 = scalar_lea.vmem %s1, %s208
      %p210 = scmp.lt.s32.totalorder %s19, 1
      %s211 = scalar_select %p210, %s19, 1
      %s212 = scalar_lea.vmem %s2, %s211
      %p213 = scmp.lt.s32.totalorder %s19, 1
      %s214 = scalar_select %p213, %s19, 1
      %s215 = scalar_lea.vmem %s3, %s214
      %p216 = scmp.eq.s32.totalorder %s20, 0
      // Predicated region
      $region29: #{chamfers_distance_loss.1} parent=27 // pred_check
        %p217 = pneg %p216
      $region30: #{chamfers_distance_loss.1} parent=27 // pred_check_branch
        %219 = sbr.rel (%p217) target = $region32
      $region31: #{chamfers_distance_loss.1} parent=27 // pred_region
        %vm220 = vcmask 7168
        %221 = vst.msk [vmem:[#allocation2] sm:$0xff] %vm220, inf
        %222 = vst.msk [vmem:[#allocation2 + $0x8] sm:$0xff] %vm220, inf
        %223 = vst.msk [vmem:[#allocation2 + $0x10] sm:$0xff] %vm220, inf
        %224 = vst.msk [vmem:[#allocation2 + $0x18] sm:$0xff] %vm220, inf
        %225 = vst.msk [vmem:[#allocation2 + $0x20] sm:$0xff] %vm220, inf
        %226 = vst.msk [vmem:[#allocation2 + $0x28] sm:$0xff] %vm220, inf
        %227 = vst.msk [vmem:[#allocation2 + $0x30] sm:$0xff] %vm220, inf
        %228 = vst.msk [vmem:[#allocation2 + $0x38] sm:$0xff] %vm220, inf
        %229 = vst.msk [vmem:[#allocation2 + $0x40] sm:$0xff] %vm220, inf
        %230 = vst.msk [vmem:[#allocation2 + $0x48] sm:$0xff] %vm220, inf
        %231 = vst.msk [vmem:[#allocation2 + $0x50] sm:$0xff] %vm220, inf
        %232 = vst.msk [vmem:[#allocation2 + $0x58] sm:$0xff] %vm220, inf
        %233 = vst.msk [vmem:[#allocation2 + $0x60] sm:$0xff] %vm220, inf
        %234 = vst.msk [vmem:[#allocation2 + $0x68] sm:$0xff] %vm220, inf
        %235 = vst.msk [vmem:[#allocation2 + $0x70] sm:$0xff] %vm220, inf
        %236 = vst.msk [vmem:[#allocation2 + $0x78] sm:$0xff] %vm220, inf
        %vm237 = vcmask 0
        %238 = vst.msk [vmem:[%s212] sm:$0x1] %vm237, 0.0
        %239 = vst.msk [vmem:[%s215] sm:$0x1] %vm237, 0.0
      $region32: #{chamfers_distance_loss.1} parent=27 // pred_fallthru
        _
      %v240 = vld [vmem:[%s202] sm:$0xff]
      %v241 = vld [vmem:[%s202 + $0x8] sm:$0xff]
      %v242 = vld [vmem:[%s202 + $0x10] sm:$0xff]
      %v243 = vld [vmem:[%s202 + $0x18] sm:$0xff]
      %v244 = vld [vmem:[%s202 + $0x20] sm:$0xff]
      %v245 = vld [vmem:[%s202 + $0x28] sm:$0xff]
      %v246 = vld [vmem:[%s202 + $0x30] sm:$0xff]
      %v247 = vld [vmem:[%s202 + $0x38] sm:$0xff]
      %v248 = vld [vmem:[%s202 + $0x40] sm:$0xff]
      %v249 = vld [vmem:[%s202 + $0x48] sm:$0xff]
      %v250 = vld [vmem:[%s202 + $0x50] sm:$0xff]
      %v251 = vld [vmem:[%s202 + $0x58] sm:$0xff]
      %v252 = vld [vmem:[%s202 + $0x60] sm:$0xff]
      %v253 = vld [vmem:[%s202 + $0x68] sm:$0xff]
      %v254 = vld [vmem:[%s202 + $0x70] sm:$0xff]
      %v255 = vld [vmem:[%s202 + $0x78] sm:$0xff]
      %v256 = vld [vmem:[%s209] sm:$0xff]
      %vm257 = vcmask 64512
      %v259 = vsel %vm257, %v240, 0
      %v262 = vsel %vm257, %v241, 0
      %v265 = vsel %vm257, %v242, 0
      %v268 = vsel %vm257, %v243, 0
      %v271 = vsel %vm257, %v244, 0
      %v274 = vsel %vm257, %v245, 0
      %v277 = vsel %vm257, %v246, 0
      %v280 = vsel %vm257, %v247, 0
      %v283 = vsel %vm257, %v248, 0
      %v286 = vsel %vm257, %v249, 0
      %v289 = vsel %vm257, %v250, 0
      %v292 = vsel %vm257, %v251, 0
      %v295 = vsel %vm257, %v252, 0
      %v298 = vsel %vm257, %v253, 0
      %v301 = vsel %vm257, %v254, 0
      %v304 = vsel %vm257, %v255, 0
      %306 = vmatprep.subr.mxu0 0.0
      %307 = vmatpush1.msra.mxu0 %v256
      %308 = vmatprep.subr.mxu0 0.0
      %309 = vmatpush1.msra.mxu0 0.0
      %310 = vmatprep.subr.mxu0 0.0
      %311 = vmatpush1.msra.mxu0 0.0
      %312 = vmatprep.subr.mxu0 0.0
      %313 = vmatpush1.msra.mxu0 0.0
      %314 = vmatprep.subr.mxu0 0.0
      %315 = vmatpush1.msra.mxu0 0.0
      %316 = vmatprep.subr.mxu0 0.0
      %317 = vmatpush1.msra.mxu0 0.0
      %318 = vmatprep.subr.mxu0 0.0
      %319 = vmatpush1.msra.mxu0 0.0
      %320 = vmatprep.subr.mxu0 0.0
      %321 = vmatpush1.msra.mxu0 0.0
      %322 = vmatprep.subr.mxu0 0.0
      %323 = vmatpush1.msra.mxu0 0.0
      %324 = vmatprep.subr.mxu0 0.0
      %325 = vmatpush1.msra.mxu0 0.0
      %326 = vmatprep.subr.mxu0 0.0
      %327 = vmatpush1.msra.mxu0 0.0
      %328 = vmatprep.subr.mxu0 0.0
      %329 = vmatpush1.msra.mxu0 0.0
      %330 = vmatprep.subr.mxu0 0.0
      %331 = vmatpush1.msra.mxu0 0.0
      %332 = vmatprep.subr.mxu0 0.0
      %333 = vmatpush1.msra.mxu0 0.0
      %334 = vmatprep.subr.mxu0 0.0
      %335 = vmatpush1.msra.mxu0 0.0
      %336 = vmatprep.subr.mxu0 0.0
      %337 = vmatpush1.msra.mxu0 0.0
      %338 = vmatprep.subr.mxu0 0.0
      %339 = vmatpush1.msra.mxu0 0.0
      %340 = vmatprep.subr.mxu0 0.0
      %341 = vmatpush1.msra.mxu0 0.0
      %342 = vmatprep.subr.mxu0 0.0
      %343 = vmatpush1.msra.mxu0 0.0
      %344 = vmatprep.subr.mxu0 0.0
      %345 = vmatpush1.msra.mxu0 0.0
      %346 = vmatprep.subr.mxu0 0.0
      %347 = vmatpush1.msra.mxu0 0.0
      %348 = vmatprep.subr.mxu0 0.0
      %349 = vmatpush1.msra.mxu0 0.0
      %350 = vmatprep.subr.mxu0 0.0
      %351 = vmatpush1.msra.mxu0 0.0
      %352 = vmatprep.subr.mxu0 0.0
      %353 = vmatpush1.msra.mxu0 0.0
      %354 = vmatprep.subr.mxu0 0.0
      %355 = vmatpush1.msra.mxu0 0.0
      %356 = vmatprep.subr.mxu0 0.0
      %357 = vmatpush1.msra.mxu0 0.0
      %358 = vmatprep.subr.mxu0 0.0
      %359 = vmatpush1.msra.mxu0 0.0
      %360 = vmatprep.subr.mxu0 0.0
      %361 = vmatpush1.msra.mxu0 0.0
      %362 = vmatprep.subr.mxu0 0.0
      %363 = vmatpush1.msra.mxu0 0.0
      %364 = vmatprep.subr.mxu0 0.0
      %365 = vmatpush1.msra.mxu0 0.0
      %366 = vmatprep.subr.mxu0 0.0
      %367 = vmatpush1.msra.mxu0 0.0
      %368 = vmatprep.subr.mxu0 0.0
      %369 = vmatpush1.msra.mxu0 0.0
      %370 = vmatprep.mubr.f32.mxu0 0.0
      %371 = vmatmul.mubr.f32.gmra.mrb[0].mxu0 %v259
      %v372 = vpop.f32.mrb[0].mxu0
      %v373 = vadd.f32 0.0, %v372
      %v374 = vpop.f32.mrb[0].mxu0
      %375 = vmatprep.mubr.f32.mxu0 0.0
      %376 = vmatmul.mubr.f32.gmra.mrb[0].mxu0 %v262
      %v377 = vpop.f32.mrb[0].mxu0
      %v378 = vadd.f32 0.0, %v377
      %v379 = vpop.f32.mrb[0].mxu0
      %380 = vmatprep.mubr.f32.mxu0 0.0
      %381 = vmatmul.mubr.f32.gmra.mrb[0].mxu0 %v265
      %v382 = vpop.f32.mrb[0].mxu0
      %v383 = vadd.f32 0.0, %v382
      %v384 = vpop.f32.mrb[0].mxu0
      %385 = vmatprep.mubr.f32.mxu0 0.0
      %386 = vmatmul.mubr.f32.gmra.mrb[0].mxu0 %v268
      %v387 = vpop.f32.mrb[0].mxu0
      %v388 = vadd.f32 0.0, %v387
      %v389 = vpop.f32.mrb[0].mxu0
      %390 = vmatprep.mubr.f32.mxu0 0.0
      %391 = vmatmul.mubr.f32.gmra.mrb[0].mxu0 %v271
      %v392 = vpop.f32.mrb[0].mxu0
      %v393 = vadd.f32 0.0, %v392
      %v394 = vpop.f32.mrb[0].mxu0
      %395 = vmatprep.mubr.f32.mxu0 0.0
      %396 = vmatmul.mubr.f32.gmra.mrb[0].mxu0 %v274
      %v397 = vpop.f32.mrb[0].mxu0
      %v398 = vadd.f32 0.0, %v397
      %v399 = vpop.f32.mrb[0].mxu0
      %400 = vmatprep.mubr.f32.mxu0 0.0
      %401 = vmatmul.mubr.f32.gmra.mrb[0].mxu0 %v277
      %v402 = vpop.f32.mrb[0].mxu0
      %v403 = vadd.f32 0.0, %v402
      %v404 = vpop.f32.mrb[0].mxu0
      %405 = vmatprep.mubr.f32.mxu0 0.0
      %406 = vmatmul.mubr.f32.gmra.mrb[0].mxu0 %v280
      %v407 = vpop.f32.mrb[0].mxu0
      %v408 = vadd.f32 0.0, %v407
      %v409 = vpop.f32.mrb[0].mxu0
      %410 = vmatprep.mubr.f32.mxu0 0.0
      %411 = vmatmul.mubr.f32.gmra.mrb[0].mxu0 %v283
      %v412 = vpop.f32.mrb[0].mxu0
      %v413 = vadd.f32 0.0, %v412
      %v414 = vpop.f32.mrb[0].mxu0
      %415 = vmatprep.mubr.f32.mxu0 0.0
      %416 = vmatmul.mubr.f32.gmra.mrb[0].mxu0 %v286
      %v417 = vpop.f32.mrb[0].mxu0
      %v418 = vadd.f32 0.0, %v417
      %v419 = vpop.f32.mrb[0].mxu0
      %420 = vmatprep.mubr.f32.mxu0 0.0
      %421 = vmatmul.mubr.f32.gmra.mrb[0].mxu0 %v289
      %v422 = vpop.f32.mrb[0].mxu0
      %v423 = vadd.f32 0.0, %v422
      %v424 = vpop.f32.mrb[0].mxu0
      %425 = vmatprep.mubr.f32.mxu0 0.0
      %426 = vmatmul.mubr.f32.gmra.mrb[0].mxu0 %v292
      %v427 = vpop.f32.mrb[0].mxu0
      %v428 = vadd.f32 0.0, %v427
      %v429 = vpop.f32.mrb[0].mxu0
      %430 = vmatprep.mubr.f32.mxu0 0.0
      %431 = vmatmul.mubr.f32.gmra.mrb[0].mxu0 %v295
      %v432 = vpop.f32.mrb[0].mxu0
      %v433 = vadd.f32 0.0, %v432
      %v434 = vpop.f32.mrb[0].mxu0
      %435 = vmatprep.mubr.f32.mxu0 0.0
      %436 = vmatmul.mubr.f32.gmra.mrb[0].mxu0 %v298
      %v437 = vpop.f32.mrb[0].mxu0
      %v438 = vadd.f32 0.0, %v437
      %v439 = vpop.f32.mrb[0].mxu0
      %440 = vmatprep.mubr.f32.mxu0 0.0
      %441 = vmatmul.mubr.f32.gmra.mrb[0].mxu0 %v301
      %v442 = vpop.f32.mrb[0].mxu0
      %v443 = vadd.f32 0.0, %v442
      %v444 = vpop.f32.mrb[0].mxu0
      %445 = vmatprep.mubr.f32.mxu0 0.0
      %446 = vmatmul.mubr.f32.gmra.mrb[0].mxu0 %v304
      %v447 = vpop.f32.mrb[0].mxu0
      %v448 = vadd.f32 0.0, %v447
      %v449 = vpop.f32.mrb[0].mxu0
      %450 = vdwg.mxu0
      %v451 = vmul.f32 %v240, %v240
      %v452 = vmul.f32 %v241, %v241
      %v453 = vmul.f32 %v242, %v242
      %v454 = vmul.f32 %v243, %v243
      %v455 = vmul.f32 %v244, %v244
      %v456 = vmul.f32 %v245, %v245
      %v457 = vmul.f32 %v246, %v246
      %v458 = vmul.f32 %v247, %v247
      %v459 = vmul.f32 %v248, %v248
      %v460 = vmul.f32 %v249, %v249
      %v461 = vmul.f32 %v250, %v250
      %v462 = vmul.f32 %v251, %v251
      %v463 = vmul.f32 %v252, %v252
      %v464 = vmul.f32 %v253, %v253
      %v465 = vmul.f32 %v254, %v254
      %v466 = vmul.f32 %v255, %v255
      %v467 = vsel %vm257, %v451, 0.0
      %468 = vadd.xlane.f32.xlu0 %v467
      %v469 = vpop.xlane.xlu0 %468
      %v470 = vsel %vm257, %v452, 0.0
      %471 = vadd.xlane.f32.xlu0 %v470
      %v472 = vpop.xlane.xlu0 %471
      %v473 = vsel %vm257, %v453, 0.0
      %474 = vadd.xlane.f32.xlu0 %v473
      %v475 = vpop.xlane.xlu0 %474
      %v476 = vsel %vm257, %v454, 0.0
      %477 = vadd.xlane.f32.xlu0 %v476
      %v478 = vpop.xlane.xlu0 %477
      %v479 = vsel %vm257, %v455, 0.0
      %480 = vadd.xlane.f32.xlu0 %v479
      %v481 = vpop.xlane.xlu0 %480
      %v482 = vsel %vm257, %v456, 0.0
      %483 = vadd.xlane.f32.xlu0 %v482
      %v484 = vpop.xlane.xlu0 %483
      %v485 = vsel %vm257, %v457, 0.0
      %486 = vadd.xlane.f32.xlu0 %v485
      %v487 = vpop.xlane.xlu0 %486
      %v488 = vsel %vm257, %v458, 0.0
      %489 = vadd.xlane.f32.xlu0 %v488
      %v490 = vpop.xlane.xlu0 %489
      %v491 = vsel %vm257, %v459, 0.0
      %492 = vadd.xlane.f32.xlu0 %v491
      %v493 = vpop.xlane.xlu0 %492
      %v494 = vsel %vm257, %v460, 0.0
      %495 = vadd.xlane.f32.xlu0 %v494
      %v496 = vpop.xlane.xlu0 %495
      %v497 = vsel %vm257, %v461, 0.0
      %498 = vadd.xlane.f32.xlu0 %v497
      %v499 = vpop.xlane.xlu0 %498
      %v500 = vsel %vm257, %v462, 0.0
      %501 = vadd.xlane.f32.xlu0 %v500
      %v502 = vpop.xlane.xlu0 %501
      %v503 = vsel %vm257, %v463, 0.0
      %504 = vadd.xlane.f32.xlu0 %v503
      %v505 = vpop.xlane.xlu0 %504
      %v506 = vsel %vm257, %v464, 0.0
      %507 = vadd.xlane.f32.xlu0 %v506
      %v508 = vpop.xlane.xlu0 %507
      %v509 = vsel %vm257, %v465, 0.0
      %510 = vadd.xlane.f32.xlu0 %v509
      %v511 = vpop.xlane.xlu0 %510
      %v512 = vsel %vm257, %v466, 0.0
      %513 = vadd.xlane.f32.xlu0 %v512
      %v514 = vpop.xlane.xlu0 %513
      %v515 = vmul.f32 %v256, %v256
      %v516 = vrot.slane %v515, 4
      %v517 = vadd.f32 %v515, %v516
      %v518 = vrot.slane %v517, 2
      %v519 = vadd.f32 %v517, %v518
      %v520 = vrot.slane %v519, 1
      %v521 = vadd.f32 %v519, %v520
      %v522 = vadd.f32 %v469, %v521
      %v523 = vadd.f32 %v472, %v521
      %v524 = vadd.f32 %v475, %v521
      %v525 = vadd.f32 %v478, %v521
      %v526 = vadd.f32 %v481, %v521
      %v527 = vadd.f32 %v484, %v521
      %v528 = vadd.f32 %v487, %v521
      %v529 = vadd.f32 %v490, %v521
      %v530 = vadd.f32 %v493, %v521
      %v531 = vadd.f32 %v496, %v521
      %v532 = vadd.f32 %v499, %v521
      %v533 = vadd.f32 %v502, %v521
      %v534 = vadd.f32 %v505, %v521
      %v535 = vadd.f32 %v508, %v521
      %v536 = vadd.f32 %v511, %v521
      %v537 = vadd.f32 %v514, %v521
      %v538 = vmul.f32 %v373, 2.0
      %v539 = vmul.f32 %v378, 2.0
      %v540 = vmul.f32 %v383, 2.0
      %v541 = vmul.f32 %v388, 2.0
      %v542 = vmul.f32 %v393, 2.0
      %v543 = vmul.f32 %v398, 2.0
      %v544 = vmul.f32 %v403, 2.0
      %v545 = vmul.f32 %v408, 2.0
      %v546 = vmul.f32 %v413, 2.0
      %v547 = vmul.f32 %v418, 2.0
      %v548 = vmul.f32 %v423, 2.0
      %v549 = vmul.f32 %v428, 2.0
      %v550 = vmul.f32 %v433, 2.0
      %v551 = vmul.f32 %v438, 2.0
      %v552 = vmul.f32 %v443, 2.0
      %v553 = vmul.f32 %v448, 2.0
      %v554 = vsub.f32 %v522, %v538
      %v555 = vsub.f32 %v523, %v539
      %v556 = vsub.f32 %v524, %v540
      %v557 = vsub.f32 %v525, %v541
      %v558 = vsub.f32 %v526, %v542
      %v559 = vsub.f32 %v527, %v543
      %v560 = vsub.f32 %v528, %v544
      %v561 = vsub.f32 %v529, %v545
      %v562 = vsub.f32 %v530, %v546
      %v563 = vsub.f32 %v531, %v547
      %v564 = vsub.f32 %v532, %v548
      %v565 = vsub.f32 %v533, %v549
      %v566 = vsub.f32 %v534, %v550
      %v567 = vsub.f32 %v535, %v551
      %v568 = vsub.f32 %v536, %v552
      %v569 = vsub.f32 %v537, %v553
      %v570 = vmax.f32 %v554, 0.0
      %v571 = vmax.f32 %v555, 0.0
      %v572 = vmax.f32 %v556, 0.0
      %v573 = vmax.f32 %v557, 0.0
      %v574 = vmax.f32 %v558, 0.0
      %v575 = vmax.f32 %v559, 0.0
      %v576 = vmax.f32 %v560, 0.0
      %v577 = vmax.f32 %v561, 0.0
      %v578 = vmax.f32 %v562, 0.0
      %v579 = vmax.f32 %v563, 0.0
      %v580 = vmax.f32 %v564, 0.0
      %v581 = vmax.f32 %v565, 0.0
      %v582 = vmax.f32 %v566, 0.0
      %v583 = vmax.f32 %v567, 0.0
      %v584 = vmax.f32 %v568, 0.0
      %v585 = vmax.f32 %v569, 0.0
      %v586 = vld [vmem:[#allocation2] sm:$0xff]
      %v587 = vld [vmem:[#allocation2 + $0x8] sm:$0xff]
      %v588 = vld [vmem:[#allocation2 + $0x10] sm:$0xff]
      %v589 = vld [vmem:[#allocation2 + $0x18] sm:$0xff]
      %v590 = vld [vmem:[#allocation2 + $0x20] sm:$0xff]
      %v591 = vld [vmem:[#allocation2 + $0x28] sm:$0xff]
      %v592 = vld [vmem:[#allocation2 + $0x30] sm:$0xff]
      %v593 = vld [vmem:[#allocation2 + $0x38] sm:$0xff]
      %v594 = vld [vmem:[#allocation2 + $0x40] sm:$0xff]
      %v595 = vld [vmem:[#allocation2 + $0x48] sm:$0xff]
      %v596 = vld [vmem:[#allocation2 + $0x50] sm:$0xff]
      %v597 = vld [vmem:[#allocation2 + $0x58] sm:$0xff]
      %v598 = vld [vmem:[#allocation2 + $0x60] sm:$0xff]
      %v599 = vld [vmem:[#allocation2 + $0x68] sm:$0xff]
      %v600 = vld [vmem:[#allocation2 + $0x70] sm:$0xff]
      %v601 = vld [vmem:[#allocation2 + $0x78] sm:$0xff]
      %602 = vmin.xlane.f32.xlu0 %v570
      %v603 = vpop.xlane.xlu0 %602
      %604 = vmin.xlane.f32.xlu0 %v571
      %v605 = vpop.xlane.xlu0 %604
      %606 = vmin.xlane.f32.xlu0 %v572
      %v607 = vpop.xlane.xlu0 %606
      %608 = vmin.xlane.f32.xlu0 %v573
      %v609 = vpop.xlane.xlu0 %608
      %610 = vmin.xlane.f32.xlu0 %v574
      %v611 = vpop.xlane.xlu0 %610
      %612 = vmin.xlane.f32.xlu0 %v575
      %v613 = vpop.xlane.xlu0 %612
      %614 = vmin.xlane.f32.xlu0 %v576
      %v615 = vpop.xlane.xlu0 %614
      %616 = vmin.xlane.f32.xlu0 %v577
      %v617 = vpop.xlane.xlu0 %616
      %618 = vmin.xlane.f32.xlu0 %v578
      %v619 = vpop.xlane.xlu0 %618
      %620 = vmin.xlane.f32.xlu0 %v579
      %v621 = vpop.xlane.xlu0 %620
      %622 = vmin.xlane.f32.xlu0 %v580
      %v623 = vpop.xlane.xlu0 %622
      %624 = vmin.xlane.f32.xlu0 %v581
      %v625 = vpop.xlane.xlu0 %624
      %626 = vmin.xlane.f32.xlu0 %v582
      %v627 = vpop.xlane.xlu0 %626
      %628 = vmin.xlane.f32.xlu0 %v583
      %v629 = vpop.xlane.xlu0 %628
      %630 = vmin.xlane.f32.xlu0 %v584
      %v631 = vpop.xlane.xlu0 %630
      %632 = vmin.xlane.f32.xlu0 %v585
      %v633 = vpop.xlane.xlu0 %632
      %v634 = vmin.f32 %v586, %v603
      %v635 = vmin.f32 %v587, %v605
      %v636 = vmin.f32 %v588, %v607
      %v637 = vmin.f32 %v589, %v609
      %v638 = vmin.f32 %v590, %v611
      %v639 = vmin.f32 %v591, %v613
      %v640 = vmin.f32 %v592, %v615
      %v641 = vmin.f32 %v593, %v617
      %v642 = vmin.f32 %v594, %v619
      %v643 = vmin.f32 %v595, %v621
      %v644 = vmin.f32 %v596, %v623
      %v645 = vmin.f32 %v597, %v625
      %v646 = vmin.f32 %v598, %v627
      %v647 = vmin.f32 %v599, %v629
      %v648 = vmin.f32 %v600, %v631
      %v649 = vmin.f32 %v601, %v633
      %vm650 = vcmask 7168
      %651 = vst.msk [vmem:[#allocation2] sm:$0xff] %vm650, %v634
      %652 = vst.msk [vmem:[#allocation2 + $0x8] sm:$0xff] %vm650, %v635
      %653 = vst.msk [vmem:[#allocation2 + $0x10] sm:$0xff] %vm650, %v636
      %654 = vst.msk [vmem:[#allocation2 + $0x18] sm:$0xff] %vm650, %v637
      %655 = vst.msk [vmem:[#allocation2 + $0x20] sm:$0xff] %vm650, %v638
      %656 = vst.msk [vmem:[#allocation2 + $0x28] sm:$0xff] %vm650, %v639
      %657 = vst.msk [vmem:[#allocation2 + $0x30] sm:$0xff] %vm650, %v640
      %658 = vst.msk [vmem:[#allocation2 + $0x38] sm:$0xff] %vm650, %v641
      %659 = vst.msk [vmem:[#allocation2 + $0x40] sm:$0xff] %vm650, %v642
      %660 = vst.msk [vmem:[#allocation2 + $0x48] sm:$0xff] %vm650, %v643
      %661 = vst.msk [vmem:[#allocation2 + $0x50] sm:$0xff] %vm650, %v644
      %662 = vst.msk [vmem:[#allocation2 + $0x58] sm:$0xff] %vm650, %v645
      %663 = vst.msk [vmem:[#allocation2 + $0x60] sm:$0xff] %vm650, %v646
      %664 = vst.msk [vmem:[#allocation2 + $0x68] sm:$0xff] %vm650, %v647
      %665 = vst.msk [vmem:[#allocation2 + $0x70] sm:$0xff] %vm650, %v648
      %666 = vst.msk [vmem:[#allocation2 + $0x78] sm:$0xff] %vm650, %v649
      %s667 = smul.u32 %s20, 128
      %v668 = vlaneseq
      %v669 = vand.u32 %v668, 127
      %v670 = vstv %s667
      %v671 = vadd.s32 %v670, %v669
      %vm672 = vcmp.lt.s32.totalorder %v671, 96
      %v673 = vmin.f32 %v570, %v574
      %v674 = vmin.f32 %v571, %v575
      %v675 = vmin.f32 %v572, %v576
      %v676 = vmin.f32 %v573, %v577
      %v677 = vmin.f32 %v673, %v578
      %v678 = vmin.f32 %v674, %v579
      %v679 = vmin.f32 %v675, %v580
      %v680 = vmin.f32 %v676, %v581
      %v681 = vmin.f32 %v677, %v582
      %v682 = vmin.f32 %v678, %v583
      %v683 = vmin.f32 %v679, %v584
      %v684 = vmin.f32 %v680, %v585
      %v685 = vmin.f32 %v681, %v682
      %v686 = vmin.f32 %v683, %v684
      %v687 = vmin.f32 %v685, %v686
      %v688 = vrot.slane %v687, 4
      %v689 = vmin.f32 %v687, %v688
      %v690 = vrot.slane %v689, 2
      %v691 = vmin.f32 %v689, %v690
      %v692 = vrot.slane %v691, 1
      %v693 = vmin.f32 %v691, %v692
      %v694 = vsel %vm672, %v693, 0.0
      %v695 = vld [vmem:[%s215] sm:$0x1]
      %696 = vadd.xlane.f32.xlu0 %v694
      %v697 = vpop.xlane.xlu0 %696
      %v698 = vadd.f32 %v697, 0.0
      %v699 = vadd.f32 %v695, %v698
      %vm700 = vcmask 0
      %701 = vst.msk [vmem:[%s215] sm:$0x1] %vm700, %v699
      // Predicated region
      $region33: #{chamfers_distance_loss.1} parent=27 // pred_check
        %p702 = pneg %p216
      $region34: #{chamfers_distance_loss.1} parent=27 // pred_check_branch
        %704 = sbr.rel (%p702) target = $region36
      $region35: #{chamfers_distance_loss.1} parent=27 // pred_region
        %v705 = vlaneseq
        %v706 = vshrl.u32 %v705, 7
        %v707 = vadd.s32 %v706, 8
        %v708 = vadd.s32 %v706, 16
        %v709 = vadd.s32 %v706, 24
        %v710 = vadd.s32 %v706, 32
        %v711 = vadd.s32 %v706, 40
        %v712 = vadd.s32 %v706, 48
        %v713 = vadd.s32 %v706, 56
        %v714 = vadd.s32 %v706, 64
        %v715 = vadd.s32 %v706, 72
        %v716 = vadd.s32 %v706, 80
        %v717 = vadd.s32 %v706, 88
        %v718 = vadd.s32 %v706, 96
        %v719 = vadd.s32 %v706, 104
        %v720 = vadd.s32 %v706, 112
        %v721 = vadd.s32 %v706, 120
        %vm722 = vcmp.lt.s32.totalorder %v706, 128
        %vm723 = vcmp.lt.s32.totalorder %v707, 128
        %vm724 = vcmp.lt.s32.totalorder %v708, 128
        %vm725 = vcmp.lt.s32.totalorder %v709, 128
        %vm726 = vcmp.lt.s32.totalorder %v710, 128
        %vm727 = vcmp.lt.s32.totalorder %v711, 128
        %vm728 = vcmp.lt.s32.totalorder %v712, 128
        %vm729 = vcmp.lt.s32.totalorder %v713, 128
        %vm730 = vcmp.lt.s32.totalorder %v714, 128
        %vm731 = vcmp.lt.s32.totalorder %v715, 128
        %vm732 = vcmp.lt.s32.totalorder %v716, 128
        %vm733 = vcmp.lt.s32.totalorder %v717, 128
        %vm734 = vcmp.lt.s32.totalorder %v718, 128
        %vm735 = vcmp.lt.s32.totalorder %v719, 128
        %vm736 = vcmp.lt.s32.totalorder %v720, 128
        %vm737 = vcmp.lt.s32.totalorder %v721, 128
        %v738 = vld [vmem:[#allocation2] sm:$0xff]
        %v739 = vld [vmem:[#allocation2 + $0x8] sm:$0xff]
        %v740 = vld [vmem:[#allocation2 + $0x10] sm:$0xff]
        %v741 = vld [vmem:[#allocation2 + $0x18] sm:$0xff]
        %v742 = vld [vmem:[#allocation2 + $0x20] sm:$0xff]
        %v743 = vld [vmem:[#allocation2 + $0x28] sm:$0xff]
        %v744 = vld [vmem:[#allocation2 + $0x30] sm:$0xff]
        %v745 = vld [vmem:[#allocation2 + $0x38] sm:$0xff]
        %v746 = vld [vmem:[#allocation2 + $0x40] sm:$0xff]
        %v747 = vld [vmem:[#allocation2 + $0x48] sm:$0xff]
        %v748 = vld [vmem:[#allocation2 + $0x50] sm:$0xff]
        %v749 = vld [vmem:[#allocation2 + $0x58] sm:$0xff]
        %v750 = vld [vmem:[#allocation2 + $0x60] sm:$0xff]
        %v751 = vld [vmem:[#allocation2 + $0x68] sm:$0xff]
        %v752 = vld [vmem:[#allocation2 + $0x70] sm:$0xff]
        %v753 = vld [vmem:[#allocation2 + $0x78] sm:$0xff]
        %v754 = vsel %vm722, %v738, 0.0
        %v755 = vsel %vm723, %v739, 0.0
        %v756 = vsel %vm724, %v740, 0.0
        %v757 = vsel %vm725, %v741, 0.0
        %v758 = vsel %vm726, %v742, 0.0
        %v759 = vsel %vm727, %v743, 0.0
        %v760 = vsel %vm728, %v744, 0.0
        %v761 = vsel %vm729, %v745, 0.0
        %v762 = vsel %vm730, %v746, 0.0
        %v763 = vsel %vm731, %v747, 0.0
        %v764 = vsel %vm732, %v748, 0.0
        %v765 = vsel %vm733, %v749, 0.0
        %v766 = vsel %vm734, %v750, 0.0
        %v767 = vsel %vm735, %v751, 0.0
        %v768 = vsel %vm736, %v752, 0.0
        %v769 = vsel %vm737, %v753, 0.0
        %v770 = vsel %vm650, %v754, 0.0
        %v771 = vsel %vm650, %v755, 0.0
        %v772 = vadd.f32 %v770, %v771
        %v773 = vsel %vm650, %v756, 0.0
        %v774 = vadd.f32 %v772, %v773
        %v775 = vsel %vm650, %v757, 0.0
        %v776 = vadd.f32 %v774, %v775
        %v777 = vsel %vm650, %v758, 0.0
        %v778 = vadd.f32 %v776, %v777
        %v779 = vsel %vm650, %v759, 0.0
        %v780 = vadd.f32 %v778, %v779
        %v781 = vsel %vm650, %v760, 0.0
        %v782 = vadd.f32 %v780, %v781
        %v783 = vsel %vm650, %v761, 0.0
        %v784 = vadd.f32 %v782, %v783
        %v785 = vsel %vm650, %v762, 0.0
        %v786 = vadd.f32 %v784, %v785
        %v787 = vsel %vm650, %v763, 0.0
        %v788 = vadd.f32 %v786, %v787
        %v789 = vsel %vm650, %v764, 0.0
        %v790 = vadd.f32 %v788, %v789
        %v791 = vsel %vm650, %v765, 0.0
        %v792 = vadd.f32 %v790, %v791
        %v793 = vsel %vm650, %v766, 0.0
        %v794 = vadd.f32 %v792, %v793
        %v795 = vsel %vm650, %v767, 0.0
        %v796 = vadd.f32 %v794, %v795
        %v797 = vsel %vm650, %v768, 0.0
        %v798 = vadd.f32 %v796, %v797
        %v799 = vsel %vm650, %v769, 0.0
        %v800 = vadd.f32 %v798, %v799
        %v801 = vrot.slane %v800, 4
        %v802 = vadd.f32 %v800, %v801
        %v803 = vrot.slane %v802, 2
        %v804 = vadd.f32 %v802, %v803
        %v805 = vrot.slane %v804, 1
        %v806 = vadd.f32 %v804, %v805
        %v807 = vadd.f32 %v806, 0.0
        %808 = vst.msk [vmem:[%s212] sm:$0x1] %vm700, %v807
      $region36: #{chamfers_distance_loss.1} parent=27 // pred_fallthru
        _
      %p809 = scmp.lt.s32.totalorder %s19, 1
      %s810 = scalar_select %p809, %s19, 1
      %s811 = scalar_lea.vmem %s2, %s810
      %p812 = scmp.lt.s32.totalorder %s19, 1
      %s813 = scalar_select %p812, %s19, 1
      %s814 = scalar_lea.vmem %s3, %s813
      // Predicated region
      $region37: #{chamfers_distance_loss.1} parent=27 // pred_check
        %p815 = pneg %p99
      $region38: #{chamfers_distance_loss.1} parent=27 // pred_check_branch
        %817 = sbr.rel (%p815) target = $region40
      $region39: #{chamfers_distance_loss.1} parent=27 // pred_region
        _
      $region40: #{chamfers_distance_loss.1} parent=27 // pred_fallthru
        _
      // Predicated region
      $region41: #{chamfers_distance_loss.1} parent=27 // pred_check
        %p818 = pneg %p125
      $region42: #{chamfers_distance_loss.1} parent=27 // pred_check_branch
        %820 = sbr.rel (%p818) target = $region44
      $region43: #{chamfers_distance_loss.1} parent=27 // pred_region
        _
      $region44: #{chamfers_distance_loss.1} parent=27 // pred_fallthru
        _
    $region28: #{chamfers_distance_loss.1} parent=5 // pred_fallthru
      _
    %p821 = scmp.le.s32.totalorder 2, %s10
    // Predicated region
    $region45: #{chamfers_distance_loss.1} parent=5 // pred_check
      %p822 = pneg %p821
    $region46: #{chamfers_distance_loss.1} parent=5 // pred_check_branch
      %824 = sbr.rel (%p822) target = $region48
    $region47: #{chamfers_distance_loss.1} parent=5 // pred_region
      %s825 = ssub.s32 %s10, 2
      // Predicated region
      $region49: #{chamfers_distance_loss.1} parent=47 // pred_check
        %p826 = pneg %p105
      $region50: #{chamfers_distance_loss.1} parent=47 // pred_check_branch
        %828 = sbr.rel (%p826) target = $region52
      $region51: #{chamfers_distance_loss.1} parent=47 // pred_region
        %p829 = scmp.lt.s32.totalorder %s21, 1
        %s830 = scalar_select %p829, %s21, 1
        %s831 = scalar_lea.vmem %s2, %s830
      $region52: #{chamfers_distance_loss.1} parent=47 // pred_fallthru
        _
      // Predicated region
      $region53: #{chamfers_distance_loss.1} parent=47 // pred_check
        %p832 = pneg %p131
      $region54: #{chamfers_distance_loss.1} parent=47 // pred_check_branch
        %834 = sbr.rel (%p832) target = $region56
      $region55: #{chamfers_distance_loss.1} parent=47 // pred_region
        %p835 = scmp.lt.s32.totalorder %s21, 1
        %s836 = scalar_select %p835, %s21, 1
        %s837 = scalar_lea.vmem %s3, %s836
      $region56: #{chamfers_distance_loss.1} parent=47 // pred_fallthru
        _
    $region48: #{chamfers_distance_loss.1} parent=5 // pred_fallthru
      _
  $region6: #{chamfers_distance_loss.1} parent=0 // loop_footer
    %s14 = sadd.s32 1, %s10
  $region7: #{chamfers_distance_loss.1} parent=0 // loop_footer_branch
    %9 = sbr.rel target = $region3
  $region8: #{chamfers_distance_loss.1} parent=0 // loop_exit
    _

</llo_original>
